<compile_context>
chip_gen: v7x
topology: tpu7x:2x2x1
jax: 0.10.0
libtpu: 0.0.40
codegen_flags: <defaults>
</compile_context>

<pallas_src>
import functools

import jax
import jax.numpy as jnp
from jax.experimental import pallas as pl
from jax.experimental.pallas import tpu as pltpu


HP = 128  # lane-padded head width: hidden (48) and output (8) both padded to one lane group


# ----------------------------------------------------------------------------
# Pallas kernel: fused Re_model head (stem epilogue + pool + two matmuls + Mish)
#   y_ref : [B, HW, S]       raw stem-conv output (channels-last, pre-bias, pre-activation)
#   w_ref : [S + HP + 3, HP] packed slab:
#             rows 0:S        W_a  (proj -> norm(1x1 Conv1d) -> w1 folded exactly; cols H: are 0)
#             rows S:S+HP     W_b  (w2.T zero-padded to [HP, HP])
#             row  S+HP       b_a  (zero-padded)
#             row  S+HP+1     b_b  (zero-padded)
#             row  S+HP+2     stem conv bias (first S lanes)
#   o_ref : [B, HP]           lane-dense output; caller slices [:, :O]
# dropout is eval-mode identity (torch: activation(dropout(w1(x)))).
# Mish: x * tanh(softplus(x)) == x * (t^2 + 2t) / (t^2 + 2t + 2), with t = e^x.
# ----------------------------------------------------------------------------
def _re_head_kernel(y_ref, w_ref, o_ref, *, S):
    _, HW, _ = y_ref.shape

    # static slices of the packed slab (zero runtime cost)
    wa = w_ref[:S, :]                          # [S, HP]
    wb = w_ref[S:S + HP, :]                    # [HP, HP]
    ba = w_ref[S + HP:S + HP + 1, :]           # [1, HP]
    bb = w_ref[S + HP + 1:S + HP + 2, :]       # [1, HP]
    sb = w_ref[S + HP + 2:S + HP + 3, :S]      # [1, S]  stem conv bias

    # --- fused stem epilogue: bias + swish + global average pool (all f32) ---
    y = y_ref[...] + sb[:, None, :]                            # [B, HW, S]
    y = y * pl.reciprocal(1.0 + jnp.exp(-y), approx=True)      # swish, EUP exp + approx recip
    pooled = jnp.sum(y, axis=1) * (1.0 / HW)                   # [B, S]  XLU sublane reduce

    # --- fused (proj -> norm -> w1) linear: bf16 MXU inputs, f32 accumulate ---
    h = jnp.dot(pooled.astype(jnp.bfloat16), wa.astype(jnp.bfloat16),
                preferred_element_type=jnp.float32) + ba       # [B, HP]

    # --- Mish in f32; clamp at 20 makes the rational factor exactly 1.0f for
    #     h >= 20 (matches torch's softplus fast path), so no select is needed.
    t = jnp.exp(jnp.minimum(h, 20.0))
    num = t * (t + 2.0)
    a = h * (num * pl.reciprocal(num + 2.0, approx=True))

    # TODO(synk): nn.Dropout is eval-mode identity here (applied before Mish in torch).

    # --- w2 linear (padded rows/cols are zero -> exact); lane-dense [B, HP] store
    out = jnp.dot(a.astype(jnp.bfloat16), wb.astype(jnp.bfloat16),
                  preferred_element_type=jnp.float32) + bb
    o_ref[...] = out.astype(o_ref.dtype)


def re_head(conv_out, w_slab, out_dim):
    """conv_out: [B, HW, S] raw stem-conv output; w_slab: [S+HP+3, HP] -> [B, out_dim]."""
    B, HW, S = conv_out.shape

    flops = (6 * B * HW * S          # bias + swish + pool
             + 2 * B * S * HP        # first matmul
             + 8 * B * HP            # bias adds + Mish rational
             + 2 * B * HP * HP)      # second matmul
    transcendentals = 2 * B * HW * S + 2 * B * HP
    bytes_accessed = 4 * (conv_out.size + w_slab.size + B * HP)

    vmem = pltpu.MemorySpace.VMEM
    out_pad = pl.pallas_call(
        functools.partial(_re_head_kernel, S=S),
        out_shape=jax.ShapeDtypeStruct((B, HP), jnp.float32),
        # Gridless: whole problem lives in VMEM (~110 KB), no 1-point pipeline
        # machinery, exactly two operands, one lane-dense output store.
        in_specs=[pl.BlockSpec(memory_space=vmem)] * 2,
        out_specs=pl.BlockSpec(memory_space=vmem),
        cost_estimate=pl.CostEstimate(
            flops=flops,
            transcendentals=transcendentals,
            bytes_accessed=bytes_accessed,
        ),
    )(conv_out, w_slab)
    return out_pad[:, :out_dim]     # trim the lane padding outside the kernel


# ----------------------------------------------------------------------------
# TODO(synk): torchvision mobilenet_v3_large backbone is not reproduced
# op-for-op; this deterministic stand-in (conv stem, NHWC) produces the raw
# pre-activation feature map; its bias/swish/pool epilogue and output
# projection are folded into the Pallas head.
# ----------------------------------------------------------------------------
def stem_conv(x_nchw, stem_w_hwio):
    # One-time NCHW -> NHWC transpose; NHWC/HWIO conv avoids XLA's per-call
    # layout transposes for NCHW on TPU (the conv dominates whole-model time).
    x = jnp.transpose(x_nchw, (0, 2, 3, 1))
    y = jax.lax.conv_general_dilated(
        x, stem_w_hwio, window_strides=(2, 2), padding="SAME",
        dimension_numbers=("NHWC", "HWIO", "NHWC"))
    B, Hc, Wc, C = y.shape
    return y.reshape(B, Hc * Wc, C)           # [B, HW, C] channels-last, contiguous


def build_params(key, feature_out, hidden, output_size, stem_ch=16):
    assert max(hidden, output_size, stem_ch) <= HP
    ks = jax.random.split(key, 10)

    # --- original-style parameters (mirror the PyTorch module's layout) ------
    stem_w = 0.1 * jax.random.normal(ks[0], (stem_ch, 3, 3, 3), jnp.float32)      # OIHW
    stem_b = 0.1 * jax.random.normal(ks[1], (stem_ch,), jnp.float32)
    proj_w = 0.1 * jax.random.normal(ks[2], (feature_out, stem_ch), jnp.float32)  # [out, in]
    proj_b = 0.1 * jax.random.normal(ks[3], (feature_out,), jnp.float32)
    wn = 0.1 * jax.random.normal(ks[4], (feature_out, feature_out, 1), jnp.float32)  # Conv1d(C,C,1)
    bn = 0.1 * jax.random.normal(ks[5], (feature_out,), jnp.float32)
    w1 = 0.1 * jax.random.normal(ks[6], (hidden, feature_out), jnp.float32)          # torch [out, in]
    b1 = 0.1 * jax.random.normal(ks[7], (hidden,), jnp.float32)
    w2 = 0.1 * jax.random.normal(ks[8], (output_size, hidden), jnp.float32)
    b2 = 0.1 * jax.random.normal(ks[9], (output_size,), jnp.float32)

    # --- exact fold of the back-to-back affine chain proj -> norm -> w1 ------
    wn2 = wn[:, :, 0]                                     # [C, C]
    w_a = proj_w.T @ wn2.T @ w1.T                         # [stem_ch, hidden]
    b_a = (proj_b @ wn2.T + bn) @ w1.T + b1               # [hidden]

    # --- pack EVERYTHING into one lane-padded slab (2 kernel operands total) -
    S = stem_ch
    w_slab = jnp.zeros((S + HP + 3, HP), jnp.float32)
    w_slab = w_slab.at[:S, :hidden].set(w_a)              # W_a (padded cols are 0)
    w_slab = w_slab.at[S:S + hidden, :output_size].set(w2.T)  # W_b (padded rows/cols 0)
    w_slab = w_slab.at[S + HP, :hidden].set(b_a)          # b_a
    w_slab = w_slab.at[S + HP + 1, :output_size].set(b2)  # b_b
    w_slab = w_slab.at[S + HP + 2, :S].set(stem_b)        # stem conv bias

    stem_w_hwio = jnp.transpose(stem_w, (2, 3, 1, 0))     # OIHW -> HWIO, once at build time
    return {"stem_w_hwio": stem_w_hwio, "w_slab": w_slab, "out_dim": output_size}


@functools.partial(jax.jit, static_argnames=("out_dim",))
def re_model_forward(x, stem_w_hwio, w_slab, out_dim):
    conv_out = stem_conv(x, stem_w_hwio)          # [B, HW, stem_ch]
    return re_head(conv_out, w_slab, out_dim)     # [B, out_dim]


if __name__ == "__main__":
    # re_dict = {'feature_out': 32, 'classificator_dropout': 0.1, 'output_size': 8}
    feature_out = 32
    hidden = int(feature_out * 1.5)   # 48
    output_size = 8
    B, Himg, Wimg = 2, 32, 32

    key = jax.random.PRNGKey(0)
    kx, kp = jax.random.split(key)
    x = jax.random.normal(kx, (B, 3, Himg, Wimg), jnp.float32)
    params = build_params(kp, feature_out, hidden, output_size)

    out = re_model_forward(x, params["stem_w_hwio"], params["w_slab"],
                           out_dim=params["out_dim"])
    out = jax.block_until_ready(out)
    assert out.shape == (B, output_size)
    print("KERNEL_OK")
</pallas_src>

<mosaic_0001>
module attributes {stable_mosaic.version = 11 : i64} {
  func.func @_re_head_kernel(%arg0: memref<2x256x16xf32, #tpu.memory_space<vmem>>, %arg1: memref<147x128xf32, #tpu.memory_space<vmem>>, %arg2: memref<2x128xf32, #tpu.memory_space<vmem>>) attributes {dimension_semantics = [], scalar_prefetch = 0 : i64, scratch_operands = 0 : i64, tpu.core_type = #tpu.core_type<tc>} {
    %c0 = arith.constant 0 : index
    %c0_0 = arith.constant 0 : index
    %0 = vector.load %arg1[%c0, %c0_0] : memref<147x128xf32, #tpu.memory_space<vmem>>, vector<16x128xf32>
    %c16 = arith.constant 16 : index
    %c0_1 = arith.constant 0 : index
    %1 = vector.load %arg1[%c16, %c0_1] : memref<147x128xf32, #tpu.memory_space<vmem>>, vector<128x128xf32>
    %c144 = arith.constant 144 : index
    %c0_2 = arith.constant 0 : index
    %2 = vector.load %arg1[%c144, %c0_2] : memref<147x128xf32, #tpu.memory_space<vmem>>, vector<1x128xf32>
    %c145 = arith.constant 145 : index
    %c0_3 = arith.constant 0 : index
    %3 = vector.load %arg1[%c145, %c0_3] : memref<147x128xf32, #tpu.memory_space<vmem>>, vector<1x128xf32>
    %c146 = arith.constant 146 : index
    %c0_4 = arith.constant 0 : index
    %4 = vector.load %arg1[%c146, %c0_4] : memref<147x128xf32, #tpu.memory_space<vmem>>, vector<1x16xf32>
    %c0_5 = arith.constant 0 : index
    %c0_6 = arith.constant 0 : index
    %c0_7 = arith.constant 0 : index
    %5 = vector.load %arg0[%c0_5, %c0_6, %c0_7] : memref<2x256x16xf32, #tpu.memory_space<vmem>>, vector<2x256x16xf32>
    %6 = vector.shape_cast %4 : vector<1x16xf32> to vector<1x1x16xf32>
    %7 = vector.broadcast %6 : vector<1x1x16xf32> to vector<2x256x16xf32>
    %8 = arith.addf %5, %7 : vector<2x256x16xf32>
    %cst = arith.constant 0.000000e+00 : f32
    %9 = vector.broadcast %cst : f32 to vector<2x256x16xf32>
    %10 = arith.subf %9, %8 : vector<2x256x16xf32>
    %11 = math.exp %10 : vector<2x256x16xf32>
    %cst_8 = arith.constant 1.000000e+00 : f32
    %12 = vector.broadcast %cst_8 : f32 to vector<2x256x16xf32>
    %13 = arith.addf %12, %11 : vector<2x256x16xf32>
    %14 = tpu.reciprocal %13 {approx = true} : vector<2x256x16xf32> -> vector<2x256x16xf32>
    %15 = arith.mulf %8, %14 : vector<2x256x16xf32>
    %cst_9 = arith.constant dense<0.000000e+00> : vector<2x16xf32>
    %16 = vector.multi_reduction <add>, %15, %cst_9 [1] : vector<2x256x16xf32> to vector<2x16xf32>
    %cst_10 = arith.constant 3.906250e-03 : f32
    %17 = vector.broadcast %cst_10 : f32 to vector<2x16xf32>
    %18 = arith.mulf %16, %17 : vector<2x16xf32>
    %19 = arith.truncf %18 : vector<2x16xf32> to vector<2x16xbf16>
    %20 = arith.truncf %0 : vector<16x128xf32> to vector<16x128xbf16>
    %cst_11 = arith.constant dense<0.000000e+00> : vector<2x128xf32>
    %21 = tpu.matmul %19, %20, %cst_11 {dimension_numbers = #tpu.dot_dimension_numbers<[1], [0], [0], [1], [0, 0, 1, 1], [], []>} : vector<2x16xbf16>, vector<16x128xbf16>, vector<2x128xf32> -> vector<2x128xf32>
    %22 = vector.broadcast %2 : vector<1x128xf32> to vector<2x128xf32>
    %23 = arith.addf %21, %22 : vector<2x128xf32>
    %cst_12 = arith.constant 2.000000e+01 : f32
    %24 = vector.broadcast %cst_12 : f32 to vector<2x128xf32>
    %25 = arith.minimumf %23, %24 : vector<2x128xf32>
    %26 = math.exp %25 : vector<2x128xf32>
    %cst_13 = arith.constant 2.000000e+00 : f32
    %27 = vector.broadcast %cst_13 : f32 to vector<2x128xf32>
    %28 = arith.addf %26, %27 : vector<2x128xf32>
    %29 = arith.mulf %26, %28 : vector<2x128xf32>
    %cst_14 = arith.constant 2.000000e+00 : f32
    %30 = vector.broadcast %cst_14 : f32 to vector<2x128xf32>
    %31 = arith.addf %29, %30 : vector<2x128xf32>
    %32 = tpu.reciprocal %31 {approx = true} : vector<2x128xf32> -> vector<2x128xf32>
    %33 = arith.mulf %29, %32 : vector<2x128xf32>
    %34 = arith.mulf %23, %33 : vector<2x128xf32>
    %35 = arith.truncf %34 : vector<2x128xf32> to vector<2x128xbf16>
    %36 = arith.truncf %1 : vector<128x128xf32> to vector<128x128xbf16>
    %cst_15 = arith.constant dense<0.000000e+00> : vector<2x128xf32>
    %37 = tpu.matmul %35, %36, %cst_15 {dimension_numbers = #tpu.dot_dimension_numbers<[1], [0], [0], [1], [0, 0, 1, 1], [], []>} : vector<2x128xbf16>, vector<128x128xbf16>, vector<2x128xf32> -> vector<2x128xf32>
    %38 = vector.broadcast %3 : vector<1x128xf32> to vector<2x128xf32>
    %39 = arith.addf %37, %38 : vector<2x128xf32>
    %c0_16 = arith.constant 0 : index
    %c0_17 = arith.constant 0 : index
    %40 = vector.load %arg2[%c0_16, %c0_17] : memref<2x128xf32, #tpu.memory_space<vmem>>, vector<2x128xf32>
    tpu.vector_store %arg2[%c0_16, %c0_17], %39 {strides = array<i32>} : memref<2x128xf32, #tpu.memory_space<vmem>>, vector<2x128xf32>,
    return
  }
}

</mosaic_0001>

<llo_original>
// kernel: re_model_forward.1
$region0: #{re_model_forward.1}
  #allocation0 [shape = 'u32[]', space=smem, size = 0x4, offset = 0x4, fixed_abs, tag = 'smem constant byte address 0x4 - core index']
  #allocation1 [shape = 'u32[144,128]{1,0:T(1,128)}', space=vmem, size = 0x12000, scoped, tag = 'internal scratch']
  %s0 = inlined_call_operand.vmem [shape: f32[2,256,16], index: 0, kind: input, shape index: {}]
  %s1 = inlined_call_operand.vmem [shape: f32[147,128], index: 1, kind: input, shape index: {}]
  %s2 = inlined_call_operand.hbm [shape: f32[2,128], index: 2, kind: output, shape index: {}]
  %s3 = sld [smem:[#allocation0]]
  $region18: #{re_model_forward.1} parent=0
    _
  %s5 = ssub.s32 1, %s3
  %s6 = scalar_select 0, %s5, %s3
  $region1: #{re_model_forward.1} parent=0
    #allocation2 [shape = 'u8[1024]{0}', space=vmem, size = 0x400, scoped, tag = 'output window, operand 0, single buffered']
    #allocation3 [shape = 's32[1]{0}', space=sflag, size = 0x4, scoped, tag = 'scoped memory for re_model_forward.1']
    %7 = vsyncpa [#allocation3], 0
    // Predicated region
    $region2: #{re_model_forward.1} parent=1 // pred_check
      _
    $region3: #{re_model_forward.1} parent=1 // pred_check_branch
      %9 = sbr.rel (0) target = $region5
    $region4: #{re_model_forward.1} parent=1 // pred_region
      _
    $region5: #{re_model_forward.1} parent=1 // pred_fallthru
      _
    // Predicated region
    $region6: #{re_model_forward.1} parent=1 // pred_check
      _
    $region7: #{re_model_forward.1} parent=1 // pred_check_branch
      %11 = sbr.rel (0) target = $region9
    $region8: #{re_model_forward.1} parent=1 // pred_region
      _
    $region9: #{re_model_forward.1} parent=1 // pred_fallthru
      _
    %v13 = vld [vmem:[%s1] sm:$0xff]
    %v14 = vld [vmem:[%s1 + $0x8] sm:$0xff]
    %v15 = vld [vmem:[%s1 + $0x10] sm:$0xff]
    %v16 = vld [vmem:[%s1 + $0x18] sm:$0xff]
    %v17 = vld [vmem:[%s1 + $0x20] sm:$0xff]
    %v18 = vld [vmem:[%s1 + $0x28] sm:$0xff]
    %v19 = vld [vmem:[%s1 + $0x30] sm:$0xff]
    %v20 = vld [vmem:[%s1 + $0x38] sm:$0xff]
    %v21 = vld [vmem:[%s1 + $0x40] sm:$0xff]
    %v22 = vld [vmem:[%s1 + $0x48] sm:$0xff]
    %v23 = vld [vmem:[%s1 + $0x50] sm:$0xff]
    %v24 = vld [vmem:[%s1 + $0x58] sm:$0xff]
    %v25 = vld [vmem:[%s1 + $0x60] sm:$0xff]
    %v26 = vld [vmem:[%s1 + $0x68] sm:$0xff]
    %v27 = vld [vmem:[%s1 + $0x70] sm:$0xff]
    %v28 = vld [vmem:[%s1 + $0x78] sm:$0xff]
    %v29 = vld [vmem:[%s1 + $0x80] sm:$0xff]
    %v30 = vld [vmem:[%s1 + $0x88] sm:$0xff]
    %v31 = vld [vmem:[%s1 + $0x90] sm:$0x1]
    %v32 = vld [vmem:[%s1 + $0x91] sm:$0x1]
    %v33 = vld [vmem:[%s1 + $0x92] sm:$0x1]
    %v34 = vld [vmem:[%s0] sm:$0xff]
    %v35 = vld [vmem:[%s0 + $0x8] sm:$0xff]
    %v36 = vld [vmem:[%s0 + $0x10] sm:$0xff]
    %v37 = vld [vmem:[%s0 + $0x18] sm:$0xff]
    %v38 = vld [vmem:[%s0 + $0x20] sm:$0xff]
    %v39 = vld [vmem:[%s0 + $0x28] sm:$0xff]
    %v40 = vld [vmem:[%s0 + $0x30] sm:$0xff]
    %v41 = vld [vmem:[%s0 + $0x38] sm:$0xff]
    %v42 = vld [vmem:[%s0 + $0x40] sm:$0xff]
    %v43 = vld [vmem:[%s0 + $0x48] sm:$0xff]
    %v44 = vld [vmem:[%s0 + $0x50] sm:$0xff]
    %v45 = vld [vmem:[%s0 + $0x58] sm:$0xff]
    %v46 = vld [vmem:[%s0 + $0x60] sm:$0xff]
    %v47 = vld [vmem:[%s0 + $0x68] sm:$0xff]
    %v48 = vld [vmem:[%s0 + $0x70] sm:$0xff]
    %v49 = vld [vmem:[%s0 + $0x78] sm:$0xff]
    %v50 = vld [vmem:[%s0 + $0x80] sm:$0xff]
    %v51 = vld [vmem:[%s0 + $0x88] sm:$0xff]
    %v52 = vld [vmem:[%s0 + $0x90] sm:$0xff]
    %v53 = vld [vmem:[%s0 + $0x98] sm:$0xff]
    %v54 = vld [vmem:[%s0 + $0xa0] sm:$0xff]
    %v55 = vld [vmem:[%s0 + $0xa8] sm:$0xff]
    %v56 = vld [vmem:[%s0 + $0xb0] sm:$0xff]
    %v57 = vld [vmem:[%s0 + $0xb8] sm:$0xff]
    %v58 = vld [vmem:[%s0 + $0xc0] sm:$0xff]
    %v59 = vld [vmem:[%s0 + $0xc8] sm:$0xff]
    %v60 = vld [vmem:[%s0 + $0xd0] sm:$0xff]
    %v61 = vld [vmem:[%s0 + $0xd8] sm:$0xff]
    %v62 = vld [vmem:[%s0 + $0xe0] sm:$0xff]
    %v63 = vld [vmem:[%s0 + $0xe8] sm:$0xff]
    %v64 = vld [vmem:[%s0 + $0xf0] sm:$0xff]
    %v65 = vld [vmem:[%s0 + $0xf8] sm:$0xff]
    %v66 = vld [vmem:[%s0 + $0x100] sm:$0xff]
    %v67 = vld [vmem:[%s0 + $0x108] sm:$0xff]
    %v68 = vld [vmem:[%s0 + $0x110] sm:$0xff]
    %v69 = vld [vmem:[%s0 + $0x118] sm:$0xff]
    %v70 = vld [vmem:[%s0 + $0x120] sm:$0xff]
    %v71 = vld [vmem:[%s0 + $0x128] sm:$0xff]
    %v72 = vld [vmem:[%s0 + $0x130] sm:$0xff]
    %v73 = vld [vmem:[%s0 + $0x138] sm:$0xff]
    %v74 = vld [vmem:[%s0 + $0x140] sm:$0xff]
    %v75 = vld [vmem:[%s0 + $0x148] sm:$0xff]
    %v76 = vld [vmem:[%s0 + $0x150] sm:$0xff]
    %v77 = vld [vmem:[%s0 + $0x158] sm:$0xff]
    %v78 = vld [vmem:[%s0 + $0x160] sm:$0xff]
    %v79 = vld [vmem:[%s0 + $0x168] sm:$0xff]
    %v80 = vld [vmem:[%s0 + $0x170] sm:$0xff]
    %v81 = vld [vmem:[%s0 + $0x178] sm:$0xff]
    %v82 = vld [vmem:[%s0 + $0x180] sm:$0xff]
    %v83 = vld [vmem:[%s0 + $0x188] sm:$0xff]
    %v84 = vld [vmem:[%s0 + $0x190] sm:$0xff]
    %v85 = vld [vmem:[%s0 + $0x198] sm:$0xff]
    %v86 = vld [vmem:[%s0 + $0x1a0] sm:$0xff]
    %v87 = vld [vmem:[%s0 + $0x1a8] sm:$0xff]
    %v88 = vld [vmem:[%s0 + $0x1b0] sm:$0xff]
    %v89 = vld [vmem:[%s0 + $0x1b8] sm:$0xff]
    %v90 = vld [vmem:[%s0 + $0x1c0] sm:$0xff]
    %v91 = vld [vmem:[%s0 + $0x1c8] sm:$0xff]
    %v92 = vld [vmem:[%s0 + $0x1d0] sm:$0xff]
    %v93 = vld [vmem:[%s0 + $0x1d8] sm:$0xff]
    %v94 = vld [vmem:[%s0 + $0x1e0] sm:$0xff]
    %v95 = vld [vmem:[%s0 + $0x1e8] sm:$0xff]
    %v96 = vld [vmem:[%s0 + $0x1f0] sm:$0xff]
    %v97 = vld [vmem:[%s0 + $0x1f8] sm:$0xff]
    %v98 = vlaneseq
    %v99 = vshrl.u32 %v98, 7
    %v100 = vsub.s32 0, %v99
    %v101 = vrot.slane %v33, %v100
    %v102 = vadd.f32 %v34, %v101
    %v103 = vadd.f32 %v35, %v101
    %v104 = vadd.f32 %v36, %v101
    %v105 = vadd.f32 %v37, %v101
    %v106 = vadd.f32 %v38, %v101
    %v107 = vadd.f32 %v39, %v101
    %v108 = vadd.f32 %v40, %v101
    %v109 = vadd.f32 %v41, %v101
    %v110 = vadd.f32 %v42, %v101
    %v111 = vadd.f32 %v43, %v101
    %v112 = vadd.f32 %v44, %v101
    %v113 = vadd.f32 %v45, %v101
    %v114 = vadd.f32 %v46, %v101
    %v115 = vadd.f32 %v47, %v101
    %v116 = vadd.f32 %v48, %v101
    %v117 = vadd.f32 %v49, %v101
    %v118 = vadd.f32 %v50, %v101
    %v119 = vadd.f32 %v51, %v101
    %v120 = vadd.f32 %v52, %v101
    %v121 = vadd.f32 %v53, %v101
    %v122 = vadd.f32 %v54, %v101
    %v123 = vadd.f32 %v55, %v101
    %v124 = vadd.f32 %v56, %v101
    %v125 = vadd.f32 %v57, %v101
    %v126 = vadd.f32 %v58, %v101
    %v127 = vadd.f32 %v59, %v101
    %v128 = vadd.f32 %v60, %v101
    %v129 = vadd.f32 %v61, %v101
    %v130 = vadd.f32 %v62, %v101
    %v131 = vadd.f32 %v63, %v101
    %v132 = vadd.f32 %v64, %v101
    %v133 = vadd.f32 %v65, %v101
    %v134 = vadd.f32 %v66, %v101
    %v135 = vadd.f32 %v67, %v101
    %v136 = vadd.f32 %v68, %v101
    %v137 = vadd.f32 %v69, %v101
    %v138 = vadd.f32 %v70, %v101
    %v139 = vadd.f32 %v71, %v101
    %v140 = vadd.f32 %v72, %v101
    %v141 = vadd.f32 %v73, %v101
    %v142 = vadd.f32 %v74, %v101
    %v143 = vadd.f32 %v75, %v101
    %v144 = vadd.f32 %v76, %v101
    %v145 = vadd.f32 %v77, %v101
    %v146 = vadd.f32 %v78, %v101
    %v147 = vadd.f32 %v79, %v101
    %v148 = vadd.f32 %v80, %v101
    %v149 = vadd.f32 %v81, %v101
    %v150 = vadd.f32 %v82, %v101
    %v151 = vadd.f32 %v83, %v101
    %v152 = vadd.f32 %v84, %v101
    %v153 = vadd.f32 %v85, %v101
    %v154 = vadd.f32 %v86, %v101
    %v155 = vadd.f32 %v87, %v101
    %v156 = vadd.f32 %v88, %v101
    %v157 = vadd.f32 %v89, %v101
    %v158 = vadd.f32 %v90, %v101
    %v159 = vadd.f32 %v91, %v101
    %v160 = vadd.f32 %v92, %v101
    %v161 = vadd.f32 %v93, %v101
    %v162 = vadd.f32 %v94, %v101
    %v163 = vadd.f32 %v95, %v101
    %v164 = vadd.f32 %v96, %v101
    %v165 = vadd.f32 %v97, %v101
    %v166 = vsub.f32 0.0, %v102
    %v167 = vsub.f32 0.0, %v103
    %v168 = vsub.f32 0.0, %v104
    %v169 = vsub.f32 0.0, %v105
    %v170 = vsub.f32 0.0, %v106
    %v171 = vsub.f32 0.0, %v107
    %v172 = vsub.f32 0.0, %v108
    %v173 = vsub.f32 0.0, %v109
    %v174 = vsub.f32 0.0, %v110
    %v175 = vsub.f32 0.0, %v111
    %v176 = vsub.f32 0.0, %v112
    %v177 = vsub.f32 0.0, %v113
    %v178 = vsub.f32 0.0, %v114
    %v179 = vsub.f32 0.0, %v115
    %v180 = vsub.f32 0.0, %v116
    %v181 = vsub.f32 0.0, %v117
    %v182 = vsub.f32 0.0, %v118
    %v183 = vsub.f32 0.0, %v119
    %v184 = vsub.f32 0.0, %v120
    %v185 = vsub.f32 0.0, %v121
    %v186 = vsub.f32 0.0, %v122
    %v187 = vsub.f32 0.0, %v123
    %v188 = vsub.f32 0.0, %v124
    %v189 = vsub.f32 0.0, %v125
    %v190 = vsub.f32 0.0, %v126
    %v191 = vsub.f32 0.0, %v127
    %v192 = vsub.f32 0.0, %v128
    %v193 = vsub.f32 0.0, %v129
    %v194 = vsub.f32 0.0, %v130
    %v195 = vsub.f32 0.0, %v131
    %v196 = vsub.f32 0.0, %v132
    %v197 = vsub.f32 0.0, %v133
    %v198 = vsub.f32 0.0, %v134
    %v199 = vsub.f32 0.0, %v135
    %v200 = vsub.f32 0.0, %v136
    %v201 = vsub.f32 0.0, %v137
    %v202 = vsub.f32 0.0, %v138
    %v203 = vsub.f32 0.0, %v139
    %v204 = vsub.f32 0.0, %v140
    %v205 = vsub.f32 0.0, %v141
    %v206 = vsub.f32 0.0, %v142
    %v207 = vsub.f32 0.0, %v143
    %v208 = vsub.f32 0.0, %v144
    %v209 = vsub.f32 0.0, %v145
    %v210 = vsub.f32 0.0, %v146
    %v211 = vsub.f32 0.0, %v147
    %v212 = vsub.f32 0.0, %v148
    %v213 = vsub.f32 0.0, %v149
    %v214 = vsub.f32 0.0, %v150
    %v215 = vsub.f32 0.0, %v151
    %v216 = vsub.f32 0.0, %v152
    %v217 = vsub.f32 0.0, %v153
    %v218 = vsub.f32 0.0, %v154
    %v219 = vsub.f32 0.0, %v155
    %v220 = vsub.f32 0.0, %v156
    %v221 = vsub.f32 0.0, %v157
    %v222 = vsub.f32 0.0, %v158
    %v223 = vsub.f32 0.0, %v159
    %v224 = vsub.f32 0.0, %v160
    %v225 = vsub.f32 0.0, %v161
    %v226 = vsub.f32 0.0, %v162
    %v227 = vsub.f32 0.0, %v163
    %v228 = vsub.f32 0.0, %v164
    %v229 = vsub.f32 0.0, %v165
    %v230 = vmul.f32 %v166, 1.442695
    %v231 = vpow.pop %v230
    %v232 = vmul.f32 %v167, 1.442695
    %v233 = vpow.pop %v232
    %v234 = vmul.f32 %v168, 1.442695
    %v235 = vpow.pop %v234
    %v236 = vmul.f32 %v169, 1.442695
    %v237 = vpow.pop %v236
    %v238 = vmul.f32 %v170, 1.442695
    %v239 = vpow.pop %v238
    %v240 = vmul.f32 %v171, 1.442695
    %v241 = vpow.pop %v240
    %v242 = vmul.f32 %v172, 1.442695
    %v243 = vpow.pop %v242
    %v244 = vmul.f32 %v173, 1.442695
    %v245 = vpow.pop %v244
    %v246 = vmul.f32 %v174, 1.442695
    %v247 = vpow.pop %v246
    %v248 = vmul.f32 %v175, 1.442695
    %v249 = vpow.pop %v248
    %v250 = vmul.f32 %v176, 1.442695
    %v251 = vpow.pop %v250
    %v252 = vmul.f32 %v177, 1.442695
    %v253 = vpow.pop %v252
    %v254 = vmul.f32 %v178, 1.442695
    %v255 = vpow.pop %v254
    %v256 = vmul.f32 %v179, 1.442695
    %v257 = vpow.pop %v256
    %v258 = vmul.f32 %v180, 1.442695
    %v259 = vpow.pop %v258
    %v260 = vmul.f32 %v181, 1.442695
    %v261 = vpow.pop %v260
    %v262 = vmul.f32 %v182, 1.442695
    %v263 = vpow.pop %v262
    %v264 = vmul.f32 %v183, 1.442695
    %v265 = vpow.pop %v264
    %v266 = vmul.f32 %v184, 1.442695
    %v267 = vpow.pop %v266
    %v268 = vmul.f32 %v185, 1.442695
    %v269 = vpow.pop %v268
    %v270 = vmul.f32 %v186, 1.442695
    %v271 = vpow.pop %v270
    %v272 = vmul.f32 %v187, 1.442695
    %v273 = vpow.pop %v272
    %v274 = vmul.f32 %v188, 1.442695
    %v275 = vpow.pop %v274
    %v276 = vmul.f32 %v189, 1.442695
    %v277 = vpow.pop %v276
    %v278 = vmul.f32 %v190, 1.442695
    %v279 = vpow.pop %v278
    %v280 = vmul.f32 %v191, 1.442695
    %v281 = vpow.pop %v280
    %v282 = vmul.f32 %v192, 1.442695
    %v283 = vpow.pop %v282
    %v284 = vmul.f32 %v193, 1.442695
    %v285 = vpow.pop %v284
    %v286 = vmul.f32 %v194, 1.442695
    %v287 = vpow.pop %v286
    %v288 = vmul.f32 %v195, 1.442695
    %v289 = vpow.pop %v288
    %v290 = vmul.f32 %v196, 1.442695
    %v291 = vpow.pop %v290
    %v292 = vmul.f32 %v197, 1.442695
    %v293 = vpow.pop %v292
    %v294 = vmul.f32 %v198, 1.442695
    %v295 = vpow.pop %v294
    %v296 = vmul.f32 %v199, 1.442695
    %v297 = vpow.pop %v296
    %v298 = vmul.f32 %v200, 1.442695
    %v299 = vpow.pop %v298
    %v300 = vmul.f32 %v201, 1.442695
    %v301 = vpow.pop %v300
    %v302 = vmul.f32 %v202, 1.442695
    %v303 = vpow.pop %v302
    %v304 = vmul.f32 %v203, 1.442695
    %v305 = vpow.pop %v304
    %v306 = vmul.f32 %v204, 1.442695
    %v307 = vpow.pop %v306
    %v308 = vmul.f32 %v205, 1.442695
    %v309 = vpow.pop %v308
    %v310 = vmul.f32 %v206, 1.442695
    %v311 = vpow.pop %v310
    %v312 = vmul.f32 %v207, 1.442695
    %v313 = vpow.pop %v312
    %v314 = vmul.f32 %v208, 1.442695
    %v315 = vpow.pop %v314
    %v316 = vmul.f32 %v209, 1.442695
    %v317 = vpow.pop %v316
    %v318 = vmul.f32 %v210, 1.442695
    %v319 = vpow.pop %v318
    %v320 = vmul.f32 %v211, 1.442695
    %v321 = vpow.pop %v320
    %v322 = vmul.f32 %v212, 1.442695
    %v323 = vpow.pop %v322
    %v324 = vmul.f32 %v213, 1.442695
    %v325 = vpow.pop %v324
    %v326 = vmul.f32 %v214, 1.442695
    %v327 = vpow.pop %v326
    %v328 = vmul.f32 %v215, 1.442695
    %v329 = vpow.pop %v328
    %v330 = vmul.f32 %v216, 1.442695
    %v331 = vpow.pop %v330
    %v332 = vmul.f32 %v217, 1.442695
    %v333 = vpow.pop %v332
    %v334 = vmul.f32 %v218, 1.442695
    %v335 = vpow.pop %v334
    %v336 = vmul.f32 %v219, 1.442695
    %v337 = vpow.pop %v336
    %v338 = vmul.f32 %v220, 1.442695
    %v339 = vpow.pop %v338
    %v340 = vmul.f32 %v221, 1.442695
    %v341 = vpow.pop %v340
    %v342 = vmul.f32 %v222, 1.442695
    %v343 = vpow.pop %v342
    %v344 = vmul.f32 %v223, 1.442695
    %v345 = vpow.pop %v344
    %v346 = vmul.f32 %v224, 1.442695
    %v347 = vpow.pop %v346
    %v348 = vmul.f32 %v225, 1.442695
    %v349 = vpow.pop %v348
    %v350 = vmul.f32 %v226, 1.442695
    %v351 = vpow.pop %v350
    %v352 = vmul.f32 %v227, 1.442695
    %v353 = vpow.pop %v352
    %v354 = vmul.f32 %v228, 1.442695
    %v355 = vpow.pop %v354
    %v356 = vmul.f32 %v229, 1.442695
    %v357 = vpow.pop %v356
    %v358 = vadd.f32 %v231, 1.0
    %v359 = vadd.f32 %v233, 1.0
    %v360 = vadd.f32 %v235, 1.0
    %v361 = vadd.f32 %v237, 1.0
    %v362 = vadd.f32 %v239, 1.0
    %v363 = vadd.f32 %v241, 1.0
    %v364 = vadd.f32 %v243, 1.0
    %v365 = vadd.f32 %v245, 1.0
    %v366 = vadd.f32 %v247, 1.0
    %v367 = vadd.f32 %v249, 1.0
    %v368 = vadd.f32 %v251, 1.0
    %v369 = vadd.f32 %v253, 1.0
    %v370 = vadd.f32 %v255, 1.0
    %v371 = vadd.f32 %v257, 1.0
    %v372 = vadd.f32 %v259, 1.0
    %v373 = vadd.f32 %v261, 1.0
    %v374 = vadd.f32 %v263, 1.0
    %v375 = vadd.f32 %v265, 1.0
    %v376 = vadd.f32 %v267, 1.0
    %v377 = vadd.f32 %v269, 1.0
    %v378 = vadd.f32 %v271, 1.0
    %v379 = vadd.f32 %v273, 1.0
    %v380 = vadd.f32 %v275, 1.0
    %v381 = vadd.f32 %v277, 1.0
    %v382 = vadd.f32 %v279, 1.0
    %v383 = vadd.f32 %v281, 1.0
    %v384 = vadd.f32 %v283, 1.0
    %v385 = vadd.f32 %v285, 1.0
    %v386 = vadd.f32 %v287, 1.0
    %v387 = vadd.f32 %v289, 1.0
    %v388 = vadd.f32 %v291, 1.0
    %v389 = vadd.f32 %v293, 1.0
    %v390 = vadd.f32 %v295, 1.0
    %v391 = vadd.f32 %v297, 1.0
    %v392 = vadd.f32 %v299, 1.0
    %v393 = vadd.f32 %v301, 1.0
    %v394 = vadd.f32 %v303, 1.0
    %v395 = vadd.f32 %v305, 1.0
    %v396 = vadd.f32 %v307, 1.0
    %v397 = vadd.f32 %v309, 1.0
    %v398 = vadd.f32 %v311, 1.0
    %v399 = vadd.f32 %v313, 1.0
    %v400 = vadd.f32 %v315, 1.0
    %v401 = vadd.f32 %v317, 1.0
    %v402 = vadd.f32 %v319, 1.0
    %v403 = vadd.f32 %v321, 1.0
    %v404 = vadd.f32 %v323, 1.0
    %v405 = vadd.f32 %v325, 1.0
    %v406 = vadd.f32 %v327, 1.0
    %v407 = vadd.f32 %v329, 1.0
    %v408 = vadd.f32 %v331, 1.0
    %v409 = vadd.f32 %v333, 1.0
    %v410 = vadd.f32 %v335, 1.0
    %v411 = vadd.f32 %v337, 1.0
    %v412 = vadd.f32 %v339, 1.0
    %v413 = vadd.f32 %v341, 1.0
    %v414 = vadd.f32 %v343, 1.0
    %v415 = vadd.f32 %v345, 1.0
    %v416 = vadd.f32 %v347, 1.0
    %v417 = vadd.f32 %v349, 1.0
    %v418 = vadd.f32 %v351, 1.0
    %v419 = vadd.f32 %v353, 1.0
    %v420 = vadd.f32 %v355, 1.0
    %v421 = vadd.f32 %v357, 1.0
    %v422 = vrcp.pop %v358
    %v423 = vrcp.pop %v359
    %v424 = vrcp.pop %v360
    %v425 = vrcp.pop %v361
    %v426 = vrcp.pop %v362
    %v427 = vrcp.pop %v363
    %v428 = vrcp.pop %v364
    %v429 = vrcp.pop %v365
    %v430 = vrcp.pop %v366
    %v431 = vrcp.pop %v367
    %v432 = vrcp.pop %v368
    %v433 = vrcp.pop %v369
    %v434 = vrcp.pop %v370
    %v435 = vrcp.pop %v371
    %v436 = vrcp.pop %v372
    %v437 = vrcp.pop %v373
    %v438 = vrcp.pop %v374
    %v439 = vrcp.pop %v375
    %v440 = vrcp.pop %v376
    %v441 = vrcp.pop %v377
    %v442 = vrcp.pop %v378
    %v443 = vrcp.pop %v379
    %v444 = vrcp.pop %v380
    %v445 = vrcp.pop %v381
    %v446 = vrcp.pop %v382
    %v447 = vrcp.pop %v383
    %v448 = vrcp.pop %v384
    %v449 = vrcp.pop %v385
    %v450 = vrcp.pop %v386
    %v451 = vrcp.pop %v387
    %v452 = vrcp.pop %v388
    %v453 = vrcp.pop %v389
    %v454 = vrcp.pop %v390
    %v455 = vrcp.pop %v391
    %v456 = vrcp.pop %v392
    %v457 = vrcp.pop %v393
    %v458 = vrcp.pop %v394
    %v459 = vrcp.pop %v395
    %v460 = vrcp.pop %v396
    %v461 = vrcp.pop %v397
    %v462 = vrcp.pop %v398
    %v463 = vrcp.pop %v399
    %v464 = vrcp.pop %v400
    %v465 = vrcp.pop %v401
    %v466 = vrcp.pop %v402
    %v467 = vrcp.pop %v403
    %v468 = vrcp.pop %v404
    %v469 = vrcp.pop %v405
    %v470 = vrcp.pop %v406
    %v471 = vrcp.pop %v407
    %v472 = vrcp.pop %v408
    %v473 = vrcp.pop %v409
    %v474 = vrcp.pop %v410
    %v475 = vrcp.pop %v411
    %v476 = vrcp.pop %v412
    %v477 = vrcp.pop %v413
    %v478 = vrcp.pop %v414
    %v479 = vrcp.pop %v415
    %v480 = vrcp.pop %v416
    %v481 = vrcp.pop %v417
    %v482 = vrcp.pop %v418
    %v483 = vrcp.pop %v419
    %v484 = vrcp.pop %v420
    %v485 = vrcp.pop %v421
    %v486 = vmul.f32 %v102, %v422
    %v487 = vmul.f32 %v103, %v423
    %v488 = vmul.f32 %v104, %v424
    %v489 = vmul.f32 %v105, %v425
    %v490 = vmul.f32 %v106, %v426
    %v491 = vmul.f32 %v107, %v427
    %v492 = vmul.f32 %v108, %v428
    %v493 = vmul.f32 %v109, %v429
    %v494 = vmul.f32 %v110, %v430
    %v495 = vmul.f32 %v111, %v431
    %v496 = vmul.f32 %v112, %v432
    %v497 = vmul.f32 %v113, %v433
    %v498 = vmul.f32 %v114, %v434
    %v499 = vmul.f32 %v115, %v435
    %v500 = vmul.f32 %v116, %v436
    %v501 = vmul.f32 %v117, %v437
    %v502 = vmul.f32 %v118, %v438
    %v503 = vmul.f32 %v119, %v439
    %v504 = vmul.f32 %v120, %v440
    %v505 = vmul.f32 %v121, %v441
    %v506 = vmul.f32 %v122, %v442
    %v507 = vmul.f32 %v123, %v443
    %v508 = vmul.f32 %v124, %v444
    %v509 = vmul.f32 %v125, %v445
    %v510 = vmul.f32 %v126, %v446
    %v511 = vmul.f32 %v127, %v447
    %v512 = vmul.f32 %v128, %v448
    %v513 = vmul.f32 %v129, %v449
    %v514 = vmul.f32 %v130, %v450
    %v515 = vmul.f32 %v131, %v451
    %v516 = vmul.f32 %v132, %v452
    %v517 = vmul.f32 %v133, %v453
    %v518 = vmul.f32 %v134, %v454
    %v519 = vmul.f32 %v135, %v455
    %v520 = vmul.f32 %v136, %v456
    %v521 = vmul.f32 %v137, %v457
    %v522 = vmul.f32 %v138, %v458
    %v523 = vmul.f32 %v139, %v459
    %v524 = vmul.f32 %v140, %v460
    %v525 = vmul.f32 %v141, %v461
    %v526 = vmul.f32 %v142, %v462
    %v527 = vmul.f32 %v143, %v463
    %v528 = vmul.f32 %v144, %v464
    %v529 = vmul.f32 %v145, %v465
    %v530 = vmul.f32 %v146, %v466
    %v531 = vmul.f32 %v147, %v467
    %v532 = vmul.f32 %v148, %v468
    %v533 = vmul.f32 %v149, %v469
    %v534 = vmul.f32 %v150, %v470
    %v535 = vmul.f32 %v151, %v471
    %v536 = vmul.f32 %v152, %v472
    %v537 = vmul.f32 %v153, %v473
    %v538 = vmul.f32 %v154, %v474
    %v539 = vmul.f32 %v155, %v475
    %v540 = vmul.f32 %v156, %v476
    %v541 = vmul.f32 %v157, %v477
    %v542 = vmul.f32 %v158, %v478
    %v543 = vmul.f32 %v159, %v479
    %v544 = vmul.f32 %v160, %v480
    %v545 = vmul.f32 %v161, %v481
    %v546 = vmul.f32 %v162, %v482
    %v547 = vmul.f32 %v163, %v483
    %v548 = vmul.f32 %v164, %v484
    %v549 = vmul.f32 %v165, %v485
    %vm550 = vcmask 130048
    %v551 = vsel %vm550, %v486, 0.0
    %v552 = vsel %vm550, %v487, 0.0
    %v553 = vadd.f32 %v551, %v552
    %v554 = vsel %vm550, %v488, 0.0
    %v555 = vadd.f32 %v553, %v554
    %v556 = vsel %vm550, %v489, 0.0
    %v557 = vadd.f32 %v555, %v556
    %v558 = vsel %vm550, %v490, 0.0
    %v559 = vadd.f32 %v557, %v558
    %v560 = vsel %vm550, %v491, 0.0
    %v561 = vadd.f32 %v559, %v560
    %v562 = vsel %vm550, %v492, 0.0
    %v563 = vadd.f32 %v561, %v562
    %v564 = vsel %vm550, %v493, 0.0
    %v565 = vadd.f32 %v563, %v564
    %v566 = vsel %vm550, %v494, 0.0
    %v567 = vadd.f32 %v565, %v566
    %v568 = vsel %vm550, %v495, 0.0
    %v569 = vadd.f32 %v567, %v568
    %v570 = vsel %vm550, %v496, 0.0
    %v571 = vadd.f32 %v569, %v570
    %v572 = vsel %vm550, %v497, 0.0
    %v573 = vadd.f32 %v571, %v572
    %v574 = vsel %vm550, %v498, 0.0
    %v575 = vadd.f32 %v573, %v574
    %v576 = vsel %vm550, %v499, 0.0
    %v577 = vadd.f32 %v575, %v576
    %v578 = vsel %vm550, %v500, 0.0
    %v579 = vadd.f32 %v577, %v578
    %v580 = vsel %vm550, %v501, 0.0
    %v581 = vadd.f32 %v579, %v580
    %v582 = vsel %vm550, %v502, 0.0
    %v583 = vadd.f32 %v581, %v582
    %v584 = vsel %vm550, %v503, 0.0
    %v585 = vadd.f32 %v583, %v584
    %v586 = vsel %vm550, %v504, 0.0
    %v587 = vadd.f32 %v585, %v586
    %v588 = vsel %vm550, %v505, 0.0
    %v589 = vadd.f32 %v587, %v588
    %v590 = vsel %vm550, %v506, 0.0
    %v591 = vadd.f32 %v589, %v590
    %v592 = vsel %vm550, %v507, 0.0
    %v593 = vadd.f32 %v591, %v592
    %v594 = vsel %vm550, %v508, 0.0
    %v595 = vadd.f32 %v593, %v594
    %v596 = vsel %vm550, %v509, 0.0
    %v597 = vadd.f32 %v595, %v596
    %v598 = vsel %vm550, %v510, 0.0
    %v599 = vadd.f32 %v597, %v598
    %v600 = vsel %vm550, %v511, 0.0
    %v601 = vadd.f32 %v599, %v600
    %v602 = vsel %vm550, %v512, 0.0
    %v603 = vadd.f32 %v601, %v602
    %v604 = vsel %vm550, %v513, 0.0
    %v605 = vadd.f32 %v603, %v604
    %v606 = vsel %vm550, %v514, 0.0
    %v607 = vadd.f32 %v605, %v606
    %v608 = vsel %vm550, %v515, 0.0
    %v609 = vadd.f32 %v607, %v608
    %v610 = vsel %vm550, %v516, 0.0
    %v611 = vadd.f32 %v609, %v610
    %v612 = vsel %vm550, %v517, 0.0
    %v613 = vadd.f32 %v611, %v612
    %v614 = vrot.slane %v613, 4
    %v615 = vadd.f32 %v613, %v614
    %v616 = vrot.slane %v615, 2
    %v617 = vadd.f32 %v615, %v616
    %v618 = vrot.slane %v617, 1
    %v619 = vadd.f32 %v617, %v618
    %v620 = vsel %vm550, %v518, 0.0
    %v621 = vsel %vm550, %v519, 0.0
    %v622 = vadd.f32 %v620, %v621
    %v623 = vsel %vm550, %v520, 0.0
    %v624 = vadd.f32 %v622, %v623
    %v625 = vsel %vm550, %v521, 0.0
    %v626 = vadd.f32 %v624, %v625
    %v627 = vsel %vm550, %v522, 0.0
    %v628 = vadd.f32 %v626, %v627
    %v629 = vsel %vm550, %v523, 0.0
    %v630 = vadd.f32 %v628, %v629
    %v631 = vsel %vm550, %v524, 0.0
    %v632 = vadd.f32 %v630, %v631
    %v633 = vsel %vm550, %v525, 0.0
    %v634 = vadd.f32 %v632, %v633
    %v635 = vsel %vm550, %v526, 0.0
    %v636 = vadd.f32 %v634, %v635
    %v637 = vsel %vm550, %v527, 0.0
    %v638 = vadd.f32 %v636, %v637
    %v639 = vsel %vm550, %v528, 0.0
    %v640 = vadd.f32 %v638, %v639
    %v641 = vsel %vm550, %v529, 0.0
    %v642 = vadd.f32 %v640, %v641
    %v643 = vsel %vm550, %v530, 0.0
    %v644 = vadd.f32 %v642, %v643
    %v645 = vsel %vm550, %v531, 0.0
    %v646 = vadd.f32 %v644, %v645
    %v647 = vsel %vm550, %v532, 0.0
    %v648 = vadd.f32 %v646, %v647
    %v649 = vsel %vm550, %v533, 0.0
    %v650 = vadd.f32 %v648, %v649
    %v651 = vsel %vm550, %v534, 0.0
    %v652 = vadd.f32 %v650, %v651
    %v653 = vsel %vm550, %v535, 0.0
    %v654 = vadd.f32 %v652, %v653
    %v655 = vsel %vm550, %v536, 0.0
    %v656 = vadd.f32 %v654, %v655
    %v657 = vsel %vm550, %v537, 0.0
    %v658 = vadd.f32 %v656, %v657
    %v659 = vsel %vm550, %v538, 0.0
    %v660 = vadd.f32 %v658, %v659
    %v661 = vsel %vm550, %v539, 0.0
    %v662 = vadd.f32 %v660, %v661
    %v663 = vsel %vm550, %v540, 0.0
    %v664 = vadd.f32 %v662, %v663
    %v665 = vsel %vm550, %v541, 0.0
    %v666 = vadd.f32 %v664, %v665
    %v667 = vsel %vm550, %v542, 0.0
    %v668 = vadd.f32 %v666, %v667
    %v669 = vsel %vm550, %v543, 0.0
    %v670 = vadd.f32 %v668, %v669
    %v671 = vsel %vm550, %v544, 0.0
    %v672 = vadd.f32 %v670, %v671
    %v673 = vsel %vm550, %v545, 0.0
    %v674 = vadd.f32 %v672, %v673
    %v675 = vsel %vm550, %v546, 0.0
    %v676 = vadd.f32 %v674, %v675
    %v677 = vsel %vm550, %v547, 0.0
    %v678 = vadd.f32 %v676, %v677
    %v679 = vsel %vm550, %v548, 0.0
    %v680 = vadd.f32 %v678, %v679
    %v681 = vsel %vm550, %v549, 0.0
    %v682 = vadd.f32 %v680, %v681
    %v683 = vrot.slane %v682, 4
    %v684 = vadd.f32 %v682, %v683
    %v685 = vrot.slane %v684, 2
    %v686 = vadd.f32 %v684, %v685
    %v687 = vrot.slane %v686, 1
    %v688 = vadd.f32 %v686, %v687
    %v689 = vmul.f32 %v619, 0.00390625
    %v690 = vmul.f32 %v688, 0.00390625
    %v691 = vpack.c.bf16 %v689, %v689
    %v692 = vpack.c.bf16 %v690, %v690
    %v693 = vpack.c.bf16 %v14, %v13
    %v694 = vlaneseq
    %v695 = vshrl.u32 %v694, 7
    %v696 = vsub.s32 0, %v695
    %v697 = vrot.slane %v31, %v696
    %v700 = vunpack.c.l.b16 %v691
    %v701 = vunpack.c.l.b16 %v692
    %vm702 = vcmask 1041409
    %v703 = vsel %vm702, %v701, %v700
    %v704 = vpack.c.b16 %v703, %v703
    %v706 = vsel %vm550, %v704, 0
    %708 = vmatprep.subr.bf16.mxu0 0
    %709 = vmatpush1.bf16.msra.mxu0 %v693
    %710 = vmatprep.subr.bf16.mxu0 0
    %711 = vmatpush1.bf16.msra.mxu0 0
    %712 = vmatprep.subr.bf16.mxu0 0
    %713 = vmatpush1.bf16.msra.mxu0 0
    %714 = vmatprep.subr.bf16.mxu0 0
    %715 = vmatpush1.bf16.msra.mxu0 0
    %716 = vmatprep.subr.bf16.mxu0 0
    %717 = vmatpush1.bf16.msra.mxu0 0
    %718 = vmatprep.subr.bf16.mxu0 0
    %719 = vmatpush1.bf16.msra.mxu0 0
    %720 = vmatprep.subr.bf16.mxu0 0
    %721 = vmatpush1.bf16.msra.mxu0 0
    %722 = vmatprep.subr.bf16.mxu0 0
    %723 = vmatpush1.bf16.msra.mxu0 0
    %724 = vmatprep.subr.bf16.mxu0 0
    %725 = vmatpush1.bf16.msra.mxu0 0
    %726 = vmatprep.subr.bf16.mxu0 0
    %727 = vmatpush1.bf16.msra.mxu0 0
    %728 = vmatprep.subr.bf16.mxu0 0
    %729 = vmatpush1.bf16.msra.mxu0 0
    %730 = vmatprep.subr.bf16.mxu0 0
    %731 = vmatpush1.bf16.msra.mxu0 0
    %732 = vmatprep.subr.bf16.mxu0 0
    %733 = vmatpush1.bf16.msra.mxu0 0
    %734 = vmatprep.subr.bf16.mxu0 0
    %735 = vmatpush1.bf16.msra.mxu0 0
    %736 = vmatprep.subr.bf16.mxu0 0
    %737 = vmatpush1.bf16.msra.mxu0 0
    %738 = vmatprep.subr.bf16.mxu0 0
    %739 = vmatpush1.bf16.msra.mxu0 0
    %740 = vmatprep.mubr.bf16.mxu0 0
    %741 = vmatmul.mubr.bf16.gmra.mrb[0].mxu0 %v706
    %v742 = vpop.f32.mrb[0].mxu0
    %v743 = vadd.f32 %v697, %v742
    %v744 = vpop.f32.mrb[0].mxu0
    %v745 = vpop.f32.mrb[0].mxu0
    %v746 = vpop.f32.mrb[0].mxu0
    %747 = vdwg.mxu0
    %v748 = vmin.f32 %v743, 20.0
    %v749 = vmul.f32 %v748, 1.442695
    %v750 = vpow.pop %v749
    %v751 = vadd.f32 %v750, 2.0
    %v752 = vmul.f32 %v750, %v751
    %v753 = vadd.f32 %v752, 2.0
    %v754 = vrcp.pop %v753
    %v755 = vmul.f32 %v752, %v754
    %v756 = vmul.f32 %v743, %v755
    %v757 = vpack.c.bf16 %v756, %v756
    %v758 = vpack.c.bf16 %v16, %v15
    %v759 = vpack.c.bf16 %v18, %v17
    %v760 = vpack.c.bf16 %v20, %v19
    %v761 = vpack.c.bf16 %v22, %v21
    %v762 = vpack.c.bf16 %v24, %v23
    %v763 = vpack.c.bf16 %v26, %v25
    %v764 = vpack.c.bf16 %v28, %v27
    %v765 = vpack.c.bf16 %v30, %v29
    %v766 = vlaneseq
    %v767 = vshrl.u32 %v766, 7
    %v768 = vsub.s32 0, %v767
    %v769 = vrot.slane %v32, %v768
    %770 = vmatprep.subr.bf16.mxu0 0
    %771 = vmatpush1.bf16.msra.mxu0 %v758
    %772 = vmatprep.subr.bf16.mxu0 0
    %773 = vmatpush1.bf16.msra.mxu0 %v759
    %774 = vmatprep.subr.bf16.mxu0 0
    %775 = vmatpush1.bf16.msra.mxu0 %v760
    %776 = vmatprep.subr.bf16.mxu0 0
    %777 = vmatpush1.bf16.msra.mxu0 %v761
    %778 = vmatprep.subr.bf16.mxu0 0
    %779 = vmatpush1.bf16.msra.mxu0 %v762
    %780 = vmatprep.subr.bf16.mxu0 0
    %781 = vmatpush1.bf16.msra.mxu0 %v763
    %782 = vmatprep.subr.bf16.mxu0 0
    %783 = vmatpush1.bf16.msra.mxu0 %v764
    %784 = vmatprep.subr.bf16.mxu0 0
    %785 = vmatpush1.bf16.msra.mxu0 %v765
    %786 = vmatprep.subr.bf16.mxu0 0
    %787 = vmatpush1.bf16.msra.mxu0 0
    %788 = vmatprep.subr.bf16.mxu0 0
    %789 = vmatpush1.bf16.msra.mxu0 0
    %790 = vmatprep.subr.bf16.mxu0 0
    %791 = vmatpush1.bf16.msra.mxu0 0
    %792 = vmatprep.subr.bf16.mxu0 0
    %793 = vmatpush1.bf16.msra.mxu0 0
    %794 = vmatprep.subr.bf16.mxu0 0
    %795 = vmatpush1.bf16.msra.mxu0 0
    %796 = vmatprep.subr.bf16.mxu0 0
    %797 = vmatpush1.bf16.msra.mxu0 0
    %798 = vmatprep.subr.bf16.mxu0 0
    %799 = vmatpush1.bf16.msra.mxu0 0
    %800 = vmatprep.subr.bf16.mxu0 0
    %801 = vmatpush1.bf16.msra.mxu0 0
    %802 = vmatprep.mubr.bf16.mxu0 0
    %803 = vmatmul.mubr.bf16.gmra.mrb[0].mxu0 %v757
    %v804 = vpop.f32.mrb[0].mxu0
    %v805 = vadd.f32 %v769, %v804
    %v806 = vpop.f32.mrb[0].mxu0
    %v807 = vpop.f32.mrb[0].mxu0
    %v808 = vpop.f32.mrb[0].mxu0
    %809 = vdwg.mxu0
    %810 = vst [vmem:[#allocation2] sm:$0x3] %v805
    // Predicated region
    $region10: #{re_model_forward.1} parent=1 // pred_check
      _
    $region11: #{re_model_forward.1} parent=1 // pred_check_branch
      %812 = sbr.rel (0) target = $region13
    $region12: #{re_model_forward.1} parent=1 // pred_region
      %s814 = ssub.s32 32, 32
      %815 = vsyncadd [#allocation3], %s814
      %s817 = sshll.u32 [#allocation2], 4
      %s818 = int_to_ptr.vmem [resolvable:$true] %s817
      %820 = dma.vmem_to_hbm [thread:$0]  %s818, 32, %s2, [#allocation3]
    $region13: #{re_model_forward.1} parent=1 // pred_fallthru
      _
    // Predicated region
    $region14: #{re_model_forward.1} parent=1 // pred_check
      _
    $region15: #{re_model_forward.1} parent=1 // pred_check_branch
      %822 = sbr.rel (0) target = $region17
    $region16: #{re_model_forward.1} parent=1 // pred_region
      %823 = dma.done [#allocation3], 32
    $region17: #{re_model_forward.1} parent=1 // pred_fallthru
      _
    %824 = vsyncpa [#allocation3], 1

</llo_original>
